<compile_context>
chip_gen: v5e
topology: v5e:2x2
jax: 0.10.0
libtpu: 0.0.40
codegen_flags: <defaults>
</compile_context>

<pallas_src>
import jax
import jax.numpy as jnp
from jax import lax
from jax.experimental import pallas as pl
from jax.experimental.pallas import tpu as pltpu


# ---------------------------------------------------------------------------
# Kernel 1: tiled  Y = X @ W^T + b   (W kept in PyTorch (out, in) layout; the
# contraction is done on W's second axis inside the kernel -> no host transpose)
# Used for (a) the hoisted GRU input projection over all timesteps and
# (b) the tied decoder.
# ---------------------------------------------------------------------------
def _linear_bt_kernel(x_ref, w_ref, b_ref, o_ref):
    x = x_ref[...].astype(jnp.bfloat16)          # MXU operands in bf16
    w = w_ref[...].astype(jnp.bfloat16)
    acc = lax.dot_general(x, w, (((1,), (1,)), ((), ())),
                          preferred_element_type=jnp.float32)
    o_ref[...] = (acc + b_ref[...]).astype(o_ref.dtype)


def _pick_block(dim, pref):
    """Largest legal block: `pref` if it evenly tiles `dim`, else the full dim."""
    return pref if (dim > pref and dim % pref == 0) else dim


def linear_bt(x, w, b, *, tm=256, tn=512):
    """x: (M, K); w: (N, K); b: (N,)  ->  x @ w.T + b  as (M, N)."""
    M, K = x.shape
    N = w.shape[0]
    bm, bn = _pick_block(M, tm), _pick_block(N, tn)
    grid = (M // bm, N // bn)
    cost = pl.CostEstimate(flops=2 * M * N * K, transcendentals=0,
                           bytes_accessed=4 * (M * K + N * K + M * N))
    return pl.pallas_call(
        _linear_bt_kernel,
        out_shape=jax.ShapeDtypeStruct((M, N), x.dtype),
        grid_spec=pltpu.PrefetchScalarGridSpec(
            num_scalar_prefetch=0,
            grid=grid,
            in_specs=[
                pl.BlockSpec((bm, K), lambda i, j: (i, 0)),   # X row tile
                pl.BlockSpec((bn, K), lambda i, j: (j, 0)),   # W row tile (== out cols)
                pl.BlockSpec((1, bn), lambda i, j: (0, j)),   # bias tile
            ],
            out_specs=pl.BlockSpec((bm, bn), lambda i, j: (i, j)),
        ),
        compiler_params=pltpu.CompilerParams(
            dimension_semantics=("parallel", "parallel")),
        cost_estimate=cost,
    )(x, w, b.reshape(1, N))


# ---------------------------------------------------------------------------
# Kernel 2: GRU recurrence over a sequence chunk.
#   gi_ref : (T_chunk, bb, 3H)  precomputed x@W_ih^T + b_ih + [b_hh_r, b_hh_z, 0]
#   h0_ref : (bb, H)            initial hidden state for this batch block
#   whh_t  : (H, 3H) bf16       recurrent weight (transposed once on host)
#   bhh_n  : (1, H)             n-gate recurrent bias (the only bias left per step)
#   out_ref: (T_chunk, bb, H)   all hidden states
#   hT_ref : (bb, H)            final hidden state; VMEM-resident recurrent state
# ---------------------------------------------------------------------------
def _gru_recurrent_kernel(gi_ref, h0_ref, whh_t_ref, bhh_n_ref, out_ref, hT_ref):
    c = pl.program_id(1)                     # sequence-chunk index ("arbitrary")
    H = h0_ref.shape[-1]
    T = gi_ref.shape[0]

    @pl.when(c == 0)
    def _():
        hT_ref[...] = h0_ref[...]            # (re)initialise state per batch block

    w = whh_t_ref[...]                       # bf16, fetched once (constant index map)
    b_n = bhh_n_ref[...]                     # f32

    def step(t, h):
        gi = gi_ref[t]                       # (bb, 3H) f32
        gh = jnp.dot(h.astype(jnp.bfloat16), w,
                     preferred_element_type=jnp.float32)
        # PyTorch GRU gate order along columns: r, z, n.
        # NOTE: for production sizes pick H as a multiple of 128 (256 on v6e/v7x)
        # so these gate slices and the output block are lane-aligned.
        r = jax.nn.sigmoid(gi[:, 0 * H:1 * H] + gh[:, 0 * H:1 * H])
        z = jax.nn.sigmoid(gi[:, 1 * H:2 * H] + gh[:, 1 * H:2 * H])
        n = jnp.tanh(gi[:, 2 * H:3 * H] + r * (gh[:, 2 * H:3 * H] + b_n))
        h_new = (1.0 - z) * n + z * h
        out_ref[t] = h_new.astype(out_ref.dtype)
        return h_new

    hT_ref[...] = lax.fori_loop(0, T, step, hT_ref[...], unroll=True)


def gru_layer(gi, h0, w_hh, b_hh, *, max_chunk=8):
    """gi: (S, B, 3H) hoisted input gates; h0: (B, H); w_hh: (3H, H); b_hh: (3H,)."""
    S, B, G = gi.shape
    H = h0.shape[-1]

    # Sequence chunk: largest divisor of S not exceeding max_chunk (size it so the
    # double-buffered (Tc, bb, 3H)/(Tc, bb, H) blocks fit VMEM: 64 MiB on v7x,
    # 128 MiB on v5e/v6e).
    Tc = 1
    for cand in range(min(S, max_chunk), 0, -1):
        if S % cand == 0:
            Tc = cand
            break

    # Batch split feeds both v7x TensorCores; only split when the sub-block stays
    # (8,128)-legal (second-to-last dim multiple of 8 or full extent).
    bb = B // 2 if (B % 2 == 0 and (B // 2) % 8 == 0) else B
    grid = (B // bb, S // Tc)

    w_hh_t = w_hh.T.astype(jnp.bfloat16)     # one-time, off the serial critical path
    b_hh_n = b_hh[2 * H:].reshape(1, H)      # only the n-gate recurrent bias remains

    cost = pl.CostEstimate(
        flops=2 * S * B * H * 3 * H + 12 * S * B * H,
        transcendentals=3 * S * B * H,
        bytes_accessed=4 * (S * B * 3 * H + S * B * H + 2 * B * H) + 2 * H * 3 * H)

    return pl.pallas_call(
        _gru_recurrent_kernel,
        out_shape=(jax.ShapeDtypeStruct((S, B, H), jnp.float32),
                   jax.ShapeDtypeStruct((B, H), jnp.float32)),
        grid_spec=pltpu.PrefetchScalarGridSpec(
            num_scalar_prefetch=0,
            grid=grid,
            in_specs=[
                pl.BlockSpec((Tc, bb, G), lambda b, c: (c, b, 0)),  # gi chunk
                pl.BlockSpec((bb, H), lambda b, c: (b, 0)),         # h0
                pl.BlockSpec((H, G), lambda b, c: (0, 0)),          # W_hh^T (resident)
                pl.BlockSpec((1, H), lambda b, c: (0, 0)),          # b_hh (n gate)
            ],
            out_specs=[
                pl.BlockSpec((Tc, bb, H), lambda b, c: (c, b, 0)),  # all hidden states
                pl.BlockSpec((bb, H), lambda b, c: (b, 0)),         # final h == state
            ],
        ),
        compiler_params=pltpu.CompilerParams(
            dimension_semantics=("parallel", "arbitrary")),
        cost_estimate=cost,
    )(gi, h0, w_hh_t, b_hh_n)


# ------------------------- Model glue (plain JAX) -------------------------

def init_params(key, num_token, num_input, num_hidden, num_layer):
    assert num_hidden == num_input
    ks = jax.random.split(key, 1 + 4 * num_layer)
    params = {}
    # encoder/decoder weights tied; uniform(-0.1, 0.1); decoder bias zero.
    params["encoder_w"] = jax.random.uniform(
        ks[0], (num_token, num_input), jnp.float32, -0.1, 0.1)
    params["decoder_b"] = jnp.zeros((num_token,), jnp.float32)
    stdv = 1.0 / jnp.sqrt(num_hidden)
    for l in range(num_layer):
        in_dim = num_input if l == 0 else num_hidden
        k0, k1, k2, k3 = ks[1 + 4 * l: 5 + 4 * l]
        params[f"w_ih_{l}"] = jax.random.uniform(
            k0, (3 * num_hidden, in_dim), jnp.float32, -stdv, stdv)
        params[f"w_hh_{l}"] = jax.random.uniform(
            k1, (3 * num_hidden, num_hidden), jnp.float32, -stdv, stdv)
        params[f"b_ih_{l}"] = jax.random.uniform(
            k2, (3 * num_hidden,), jnp.float32, -stdv, stdv)
        params[f"b_hh_{l}"] = jax.random.uniform(
            k3, (3 * num_hidden,), jnp.float32, -stdv, stdv)
    return params


def gru_model_forward(params, tokens, hidden, num_layer):
    S, B = tokens.shape
    H = hidden.shape[-1]
    # Embedding lookup (gather glue); dropout = identity (eval mode).
    x = jnp.take(params["encoder_w"], tokens.reshape(-1), axis=0)   # (S*B, I)
    finals = []
    for l in range(num_layer):
        w_ih, w_hh = params[f"w_ih_{l}"], params[f"w_hh_{l}"]
        b_ih, b_hh = params[f"b_ih_{l}"], params[f"b_hh_{l}"]
        # Fold b_ih and the r/z parts of b_hh into the hoisted input projection.
        b_fold = b_ih + jnp.concatenate([b_hh[:2 * H],
                                         jnp.zeros((H,), b_hh.dtype)])
        gi = linear_bt(x, w_ih, b_fold).reshape(S, B, 3 * H)        # hoisted matmul
        y, hT = gru_layer(gi, hidden[l], w_hh, b_hh)
        finals.append(hT)
        x = y.reshape(S * B, H)
        # inter-layer dropout = identity (eval mode)
    h_out = jnp.stack(finals, axis=0)                               # (L, B, H)
    # Tied decoder: contracts against encoder_w inside the kernel (no host .T).
    logits = linear_bt(x, params["encoder_w"], params["decoder_b"])
    return logits.reshape(S, B, -1), h_out


# ------------------------- Pure-JAX f32 reference -------------------------

def gru_model_reference(params, tokens, hidden, num_layer):
    x = jnp.take(params["encoder_w"], tokens, axis=0)
    finals = []
    for l in range(num_layer):
        w_ih, w_hh = params[f"w_ih_{l}"], params[f"w_hh_{l}"]
        b_ih, b_hh = params[f"b_ih_{l}"], params[f"b_hh_{l}"]
        H = hidden.shape[-1]

        def step(h, xt):
            gi = xt @ w_ih.T + b_ih
            gh = h @ w_hh.T + b_hh
            r = jax.nn.sigmoid(gi[:, :H] + gh[:, :H])
            z = jax.nn.sigmoid(gi[:, H:2 * H] + gh[:, H:2 * H])
            n = jnp.tanh(gi[:, 2 * H:] + r * gh[:, 2 * H:])
            h_new = (1.0 - z) * n + z * h
            return h_new, h_new

        hT, ys = jax.lax.scan(step, hidden[l], x)
        finals.append(hT)
        x = ys
    h_out = jnp.stack(finals, axis=0)
    logits = x @ params["encoder_w"].T + params["decoder_b"]
    return logits, h_out


# ------------------------- main -------------------------

if __name__ == "__main__":
    num_token, num_input, num_hidden, num_layer = 16, 32, 32, 2
    seq_len, batch = 8, 4

    key = jax.random.PRNGKey(0)
    kp, kt = jax.random.split(key)
    params = init_params(kp, num_token, num_input, num_hidden, num_layer)
    tokens = jax.random.randint(kt, (seq_len, batch), 0, num_token, jnp.int32)
    hidden0 = jnp.zeros((num_layer, batch, num_hidden), jnp.float32)

    decoded, hidden_out = gru_model_forward(params, tokens, hidden0, num_layer)
    decoded = jax.block_until_ready(decoded)
    hidden_out = jax.block_until_ready(hidden_out)

    ref_dec, ref_hid = gru_model_reference(params, tokens, hidden0, num_layer)
    assert decoded.shape == (seq_len, batch, num_token)
    assert hidden_out.shape == (num_layer, batch, num_hidden)
    # Tolerance reflects bf16 MXU operands in the kernels vs. the pure-f32 reference.
    assert jnp.allclose(decoded, ref_dec, atol=2e-2, rtol=2e-2)
    assert jnp.allclose(hidden_out, ref_hid, atol=2e-2, rtol=2e-2)

    print("KERNEL_OK")
</pallas_src>

<mosaic_0001>
module attributes {stable_mosaic.version = 11 : i64} {
  func.func @_linear_bt_kernel(%arg0: i32, %arg1: i32, %arg2: memref<32x32xf32, #tpu.memory_space<vmem>>, %arg3: memref<96x32xf32, #tpu.memory_space<vmem>>, %arg4: memref<1x96xf32, #tpu.memory_space<vmem>>, %arg5: memref<32x96xf32, #tpu.memory_space<vmem>>) attributes {dimension_semantics = [#tpu.dimension_semantics<parallel>, #tpu.dimension_semantics<parallel>], iteration_bounds = array<i64: 1, 1>, scalar_prefetch = 0 : i64, scratch_operands = 0 : i64, tpu.core_type = #tpu.core_type<tc>, window_params = [{transform_indices = @transform_0, window_bounds = array<i64: 32, 32>}, {transform_indices = @transform_1, window_bounds = array<i64: 96, 32>}, {transform_indices = @transform_2, window_bounds = array<i64: 1, 96>}, {transform_indices = @transform_3, window_bounds = array<i64: 32, 96>}]} {
    %c0 = arith.constant 0 : index
    %c0_0 = arith.constant 0 : index
    %0 = vector.load %arg2[%c0, %c0_0] : memref<32x32xf32, #tpu.memory_space<vmem>>, vector<32x32xf32>
    %1 = arith.truncf %0 : vector<32x32xf32> to vector<32x32xbf16>
    %c0_1 = arith.constant 0 : index
    %c0_2 = arith.constant 0 : index
    %2 = vector.load %arg3[%c0_1, %c0_2] : memref<96x32xf32, #tpu.memory_space<vmem>>, vector<96x32xf32>
    %3 = arith.truncf %2 : vector<96x32xf32> to vector<96x32xbf16>
    %cst = arith.constant dense<0.000000e+00> : vector<32x96xf32>
    %4 = tpu.matmul %1, %3, %cst {dimension_numbers = #tpu.dot_dimension_numbers<[1], [1], [0], [0], [0, 0, 1, 0], [], []>} : vector<32x32xbf16>, vector<96x32xbf16>, vector<32x96xf32> -> vector<32x96xf32>
    %c0_3 = arith.constant 0 : index
    %c0_4 = arith.constant 0 : index
    %5 = vector.load %arg4[%c0_3, %c0_4] : memref<1x96xf32, #tpu.memory_space<vmem>>, vector<1x96xf32>
    %6 = vector.broadcast %5 : vector<1x96xf32> to vector<32x96xf32>
    %7 = arith.addf %4, %6 : vector<32x96xf32>
    %c0_5 = arith.constant 0 : index
    %c0_6 = arith.constant 0 : index
    %8 = vector.load %arg5[%c0_5, %c0_6] : memref<32x96xf32, #tpu.memory_space<vmem>>, vector<32x96xf32>
    tpu.vector_store %arg5[%c0_5, %c0_6], %7 {strides = array<i32>} : memref<32x96xf32, #tpu.memory_space<vmem>>, vector<32x96xf32>,
    return
  }
  func.func @transform_0(%arg0: i32, %arg1: i32) -> (i32, i32) {
    %c0_i32 = arith.constant 0 : i32
    %c0_i32_0 = arith.constant 0 : i32
    return %arg0, %c0_i32 : i32, i32
  }
  func.func @transform_1(%arg0: i32, %arg1: i32) -> (i32, i32) {
    %c0_i32 = arith.constant 0 : i32
    %c0_i32_0 = arith.constant 0 : i32
    return %arg1, %c0_i32 : i32, i32
  }
  func.func @transform_2(%arg0: i32, %arg1: i32) -> (i32, i32) {
    %c0_i32 = arith.constant 0 : i32
    %c0_i32_0 = arith.constant 0 : i32
    return %c0_i32, %arg1 : i32, i32
  }
  func.func @transform_3(%arg0: i32, %arg1: i32) -> (i32, i32) {
    %c0_i32 = arith.constant 0 : i32
    return %arg0, %arg1 : i32, i32
  }
}

</mosaic_0001>

<llo_original>
// kernel: tpu_custom_call.1
$region0: #{tpu_custom_call.1}
  #allocation0 [shape = 'u32[]', space=smem, size = 0x4, offset = 0x4, fixed_abs, tag = 'smem constant byte address 0x4 - core index']
  #allocation1 [shape = 'u32[72,128]{1,0:T(1,128)}', space=vmem, size = 0x9000, scoped, tag = 'internal scratch']
  %s0 = inlined_call_operand.vmem [shape: f32[32,32], index: 0, kind: input, shape index: {}]
  %s1 = inlined_call_operand.vmem [shape: f32[96,32], index: 1, kind: input, shape index: {}]
  %s2 = inlined_call_operand.vmem [shape: f32[1,96], index: 2, kind: input, shape index: {}]
  %s3 = inlined_call_operand.hbm [shape: f32[32,96], index: 3, kind: output, shape index: {}]
  %s4 = sld [smem:[#allocation0]]
  $region22: #{tpu_custom_call.1} parent=0
    _
  %s6 = ssub.s32 1, %s4
  %s7 = scalar_select 0, %s6, %s4
  $region1: #{tpu_custom_call.1} parent=0
    #allocation2 [shape = 'u8[16384]{0}', space=vmem, size = 0x4000, scoped, tag = 'output window, operand 0, single buffered']
    #allocation3 [shape = 's32[1]{0}', space=sflag, size = 0x4, scoped, tag = 'scoped memory for tpu_custom_call.1']
    %8 = vsyncpa [#allocation3], 0
    // Predicated region
    $region2: #{tpu_custom_call.1} parent=1 // pred_check
      _
    $region3: #{tpu_custom_call.1} parent=1 // pred_check_branch
      %10 = sbr.rel (0) target = $region5
    $region4: #{tpu_custom_call.1} parent=1 // pred_region
      _
    $region5: #{tpu_custom_call.1} parent=1 // pred_fallthru
      _
    // Predicated region
    $region6: #{tpu_custom_call.1} parent=1 // pred_check
      _
    $region7: #{tpu_custom_call.1} parent=1 // pred_check_branch
      %12 = sbr.rel (0) target = $region9
    $region8: #{tpu_custom_call.1} parent=1 // pred_region
      _
    $region9: #{tpu_custom_call.1} parent=1 // pred_fallthru
      _
    // Predicated region
    $region10: #{tpu_custom_call.1} parent=1 // pred_check
      _
    $region11: #{tpu_custom_call.1} parent=1 // pred_check_branch
      %14 = sbr.rel (0) target = $region13
    $region12: #{tpu_custom_call.1} parent=1 // pred_region
      _
    $region13: #{tpu_custom_call.1} parent=1 // pred_fallthru
      _
    %v16 = vld [vmem:[%s0] sm:$0xff]
    %v17 = vld [vmem:[%s0 + $0x8] sm:$0xff]
    %v18 = vld [vmem:[%s0 + $0x10] sm:$0xff]
    %v19 = vld [vmem:[%s0 + $0x18] sm:$0xff]
    %v20 = vpack.c.bf16 %v17, %v16
    %v21 = vpack.c.bf16 %v19, %v18
    %v22 = vld [vmem:[%s1] sm:$0xff]
    %v23 = vld [vmem:[%s1 + $0x8] sm:$0xff]
    %v24 = vld [vmem:[%s1 + $0x10] sm:$0xff]
    %v25 = vld [vmem:[%s1 + $0x18] sm:$0xff]
    %v26 = vld [vmem:[%s1 + $0x20] sm:$0xff]
    %v27 = vld [vmem:[%s1 + $0x28] sm:$0xff]
    %v28 = vld [vmem:[%s1 + $0x30] sm:$0xff]
    %v29 = vld [vmem:[%s1 + $0x38] sm:$0xff]
    %v30 = vld [vmem:[%s1 + $0x40] sm:$0xff]
    %v31 = vld [vmem:[%s1 + $0x48] sm:$0xff]
    %v32 = vld [vmem:[%s1 + $0x50] sm:$0xff]
    %v33 = vld [vmem:[%s1 + $0x58] sm:$0xff]
    %v34 = vpack.c.bf16 %v23, %v22
    %v35 = vpack.c.bf16 %v25, %v24
    %v36 = vpack.c.bf16 %v27, %v26
    %v37 = vpack.c.bf16 %v29, %v28
    %v38 = vpack.c.bf16 %v31, %v30
    %v39 = vpack.c.bf16 %v33, %v32
    %v40 = vld [vmem:[%s2] sm:$0x1]
    %v42 = vperm.slane %v40, 0
    %vm44 = vcmask 261120
    %v46 = vsel %vm44, %v20, 0
    %v49 = vsel %vm44, %v21, 0
    %v52 = vsel %vm44, %v34, 0
    %v55 = vsel %vm44, %v35, 0
    %v58 = vsel %vm44, %v36, 0
    %v61 = vsel %vm44, %v37, 0
    %v64 = vsel %vm44, %v38, 0
    %v67 = vsel %vm44, %v39, 0
    %69 = vmatpush.bf16.xpose.msra.mxu0 0
    %70 = vmatpush.bf16.xpose.msra.mxu0 0
    %71 = vmatpush.bf16.xpose.msra.mxu0 %v67
    %72 = vmatpush.bf16.xpose.msra.mxu0 %v64
    %73 = vmatpush.bf16.xpose.msra.mxu0 %v61
    %74 = vmatpush.bf16.xpose.msra.mxu0 %v58
    %75 = vmatpush.bf16.xpose.msra.mxu0 %v55
    %76 = vmatpush.bf16.xpose.msra.mxu0 %v52
    %77 = vmatmul.bf16.gmra.mxu0 %v46
    %v78 = vpop.f32.mrf.mxu0
    %v79 = vadd.f32 %v42, %v78
    %v80 = vpop.f32.mrf.mxu0
    %v81 = vadd.f32 %v42, %v80
    %82 = vmatmul.bf16.gmra.mxu0 %v49
    %v83 = vpop.f32.mrf.mxu0
    %v84 = vadd.f32 %v42, %v83
    %v85 = vpop.f32.mrf.mxu0
    %v86 = vadd.f32 %v42, %v85
    %87 = vdwg.mxu0
    %vm88 = vcmask 785408
    %89 = vst.msk [vmem:[#allocation2] sm:$0xff] %vm88, %v79
    %90 = vst.msk [vmem:[#allocation2 + $0x8] sm:$0xff] %vm88, %v81
    %91 = vst.msk [vmem:[#allocation2 + $0x10] sm:$0xff] %vm88, %v84
    %92 = vst.msk [vmem:[#allocation2 + $0x18] sm:$0xff] %vm88, %v86
    // Predicated region
    $region14: #{tpu_custom_call.1} parent=1 // pred_check
      _
    $region15: #{tpu_custom_call.1} parent=1 // pred_check_branch
      %94 = sbr.rel (0) target = $region17
    $region16: #{tpu_custom_call.1} parent=1 // pred_region
      %96 = vsyncadd [#allocation3], 0
      %s97 = sshll.u32 [#allocation2], 4
      %s98 = int_to_ptr.vmem [resolvable:$true] %s97
      %s99 = sshll.u32 %s3, 4
      %s100 = int_to_ptr.hbm [resolvable:$true] %s99
      %105 = dma.vmem_to_hbm [thread:$0]  %s98, 512, %s100, [#allocation3], 128, 128, 8
    $region17: #{tpu_custom_call.1} parent=1 // pred_fallthru
      _
    // Predicated region
    $region18: #{tpu_custom_call.1} parent=1 // pred_check
      _
    $region19: #{tpu_custom_call.1} parent=1 // pred_check_branch
      %107 = sbr.rel (0) target = $region21
    $region20: #{tpu_custom_call.1} parent=1 // pred_region
      %109 = dma.done [#allocation3], 512
    $region21: #{tpu_custom_call.1} parent=1 // pred_fallthru
      _
    %110 = vsyncpa [#allocation3], 1

</llo_original>
